<compile_context>
chip_gen: v5e
topology: v5e:2x2
jax: 0.10.0
libtpu: 0.0.40
codegen_flags: <defaults>
</compile_context>

<pallas_src>
import functools

import jax
import jax.numpy as jnp
from jax.experimental import pallas as pl
from jax.experimental.pallas import tpu as pltpu


def _critic_kernel(xT_ref, w0_ref, b0_ref, w1_ref, b1_ref, w2_ref, b2_ref, oT_ref):
    # Layer 0: h = tanh(W0 @ x^T + b0)                [hid, bb], f32 accum.
    h = jnp.dot(w0_ref[...], xT_ref[...], preferred_element_type=jnp.float32)
    h = jnp.tanh(h + b0_ref[...])
    # Layer 1: h = tanh(W1 @ h + b1)                  [hid, bb]
    h = jnp.dot(w1_ref[...], h.astype(w1_ref.dtype),
                preferred_element_type=jnp.float32)
    h = jnp.tanh(h + b1_ref[...])
    # Output layer (no non-linearity): o = W2 @ h + b2   [out, bb] lane-dense.
    o = jnp.dot(w2_ref[...], h.astype(w2_ref.dtype),
                preferred_element_type=jnp.float32)
    oT_ref[...] = (o + b2_ref[...]).astype(oT_ref.dtype)


def _round_up(n, m):
    return ((n + m - 1) // m) * m


@functools.partial(jax.jit, static_argnames=("block_b",))
def nonlinear_critic_forward(x, w0, b0, w1, b1, w2, b2, *, block_b=512):
    B, in_dim = x.shape
    hid = w0.shape[0]
    out_dim = w2.shape[0]

    # Lane-aligned batch tile; no divisibility requirement on B (we pad).
    block_b = max(128, _round_up(block_b, 128))
    bb = min(block_b, _round_up(B, 128))
    B_pad = _round_up(B, bb)
    # v7x has 2 TensorCores: keep >= 2 grid steps when the tile can be split
    # without breaking 128-lane alignment.
    if B_pad // bb < 2 and bb >= 256 and bb % 256 == 0:
        bb //= 2
    grid = (B_pad // bb,)

    # Transposed + bf16 operands for the MXU; biases stay f32.
    x_t = jnp.pad(x, ((0, B_pad - B), (0, 0))).T.astype(jnp.bfloat16)
    w0b, w1b, w2b = (w.astype(jnp.bfloat16) for w in (w0, w1, w2))
    b0f, b1f, b2f = (b.astype(jnp.float32) for b in (b0, b1, b2))

    # Resident (constant block-index) operands.
    # TODO(synk): if hidden_dim is ever scaled to >= 2048, single-buffer the
    # weight BlockSpecs / raise vmem_limit_bytes for v7x's 64 MiB VMEM.
    const = lambda shape: pl.BlockSpec(shape, lambda i: (0, 0))

    flops = 2 * B_pad * (in_dim * hid + hid * hid + hid * out_dim)
    transcendentals = 2 * B_pad * hid
    bytes_accessed = (
        2 * B_pad * in_dim                                    # x (bf16)
        + 2 * (in_dim * hid + hid * hid + hid * out_dim)      # weights (bf16)
        + 4 * (2 * hid + out_dim)                             # biases (f32)
        + jnp.dtype(x.dtype).itemsize * B_pad * out_dim       # output
    )

    o_t = pl.pallas_call(
        _critic_kernel,
        out_shape=jax.ShapeDtypeStruct((out_dim, B_pad), x.dtype),
        grid_spec=pltpu.PrefetchScalarGridSpec(
            num_scalar_prefetch=0,
            grid=grid,
            in_specs=[
                pl.BlockSpec((in_dim, bb), lambda i: (0, i)),  # x^T batch tile
                const((hid, in_dim)),    # w0
                const((hid, 1)),         # b0
                const((hid, hid)),       # w1
                const((hid, 1)),         # b1
                const((out_dim, hid)),   # w2
                const((out_dim, 1)),     # b2
            ],
            out_specs=pl.BlockSpec((out_dim, bb), lambda i: (0, i)),
        ),
        compiler_params=pltpu.CompilerParams(
            dimension_semantics=("parallel",),
        ),
        cost_estimate=pl.CostEstimate(
            flops=flops,
            transcendentals=transcendentals,
            bytes_accessed=bytes_accessed,
        ),
    )(x_t, w0b, b0f, w1b, b1f, w2b, b2f)

    # Back to the caller's [batch, out_dim] layout (free layout plumbing).
    return o_t.T[:B]


def init_params(key, input_dim, hidden_dim, output_dim, dtype=jnp.float32):
    """Params mirroring nn.Linear's U(-1/sqrt(fan_in), +1/sqrt(fan_in)) init.

    Weights in PyTorch layout [fan_out, fan_in]; biases [fan_out, 1].
    """
    ks = jax.random.split(key, 6)

    def lin(kw, kb, fan_in, fan_out):
        bound = 1.0 / (fan_in ** 0.5)
        w = jax.random.uniform(kw, (fan_out, fan_in), dtype, -bound, bound)
        b = jax.random.uniform(kb, (fan_out, 1), dtype, -bound, bound)
        return w, b

    w0, b0 = lin(ks[0], ks[1], input_dim, hidden_dim)
    w1, b1 = lin(ks[2], ks[3], hidden_dim, hidden_dim)
    w2, b2 = lin(ks[4], ks[5], hidden_dim, output_dim)
    return w0, b0, w1, b1, w2, b2


def reference_forward_f32(x, w0, b0, w1, b1, w2, b2):
    """Pure-f32 reference (module semantics)."""
    h = jnp.tanh(x @ w0.T + b0.T)
    h = jnp.tanh(h @ w1.T + b1.T)
    return h @ w2.T + b2.T


def reference_forward_bf16(x, w0, b0, w1, b1, w2, b2):
    """Reference matching the kernel's numerics (bf16 operands, f32 accum)."""
    bf, f32 = jnp.bfloat16, jnp.float32
    h = jnp.dot(x.astype(bf), w0.astype(bf).T, preferred_element_type=f32) + b0.T
    h = jnp.tanh(h)
    h = jnp.dot(h.astype(bf), w1.astype(bf).T, preferred_element_type=f32) + b1.T
    h = jnp.tanh(h)
    o = jnp.dot(h.astype(bf), w2.astype(bf).T, preferred_element_type=f32) + b2.T
    return o.astype(x.dtype)


if __name__ == "__main__":
    # Small shapes consistent with the module: a critic mapping a state vector
    # to a scalar value.
    batch, input_dim, hidden_dim, output_dim = 8, 16, 32, 1

    key = jax.random.PRNGKey(0)
    kx, kp = jax.random.split(key)
    x = jax.random.normal(kx, (batch, input_dim), jnp.float32)
    params = init_params(kp, input_dim, hidden_dim, output_dim)

    out = jax.block_until_ready(nonlinear_critic_forward(x, *params))
    assert out.shape == (batch, output_dim)
    assert jnp.allclose(out, reference_forward_bf16(x, *params),
                        atol=1e-4, rtol=1e-4)
    assert jnp.allclose(out, reference_forward_f32(x, *params),
                        atol=5e-2, rtol=5e-2)

    # Exercise the padded / multi-tile path: batch not a multiple of the tile.
    x2 = jax.random.normal(jax.random.PRNGKey(1), (1000, input_dim), jnp.float32)
    out2 = jax.block_until_ready(nonlinear_critic_forward(x2, *params))
    assert out2.shape == (1000, output_dim)
    assert jnp.allclose(out2, reference_forward_bf16(x2, *params),
                        atol=1e-4, rtol=1e-4)

    print("KERNEL_OK")
</pallas_src>

<mosaic_0001>
module attributes {stable_mosaic.version = 11 : i64} {
  func.func @_critic_kernel(%arg0: i32, %arg1: memref<16x128xbf16, #tpu.memory_space<vmem>>, %arg2: memref<32x16xbf16, #tpu.memory_space<vmem>>, %arg3: memref<32x1xf32, #tpu.memory_space<vmem>>, %arg4: memref<32x32xbf16, #tpu.memory_space<vmem>>, %arg5: memref<32x1xf32, #tpu.memory_space<vmem>>, %arg6: memref<1x32xbf16, #tpu.memory_space<vmem>>, %arg7: memref<1x1xf32, #tpu.memory_space<vmem>>, %arg8: memref<1x128xf32, #tpu.memory_space<vmem>>) attributes {dimension_semantics = [#tpu.dimension_semantics<parallel>], iteration_bounds = array<i64: 1>, scalar_prefetch = 0 : i64, scratch_operands = 0 : i64, tpu.core_type = #tpu.core_type<tc>, window_params = [{transform_indices = @transform_0, window_bounds = array<i64: 16, 128>}, {pipeline_mode = #tpu.pipeline_mode<synchronous>, transform_indices = @transform_1, window_bounds = array<i64: 32, 16>}, {pipeline_mode = #tpu.pipeline_mode<synchronous>, transform_indices = @transform_2, window_bounds = array<i64: 32, 1>}, {pipeline_mode = #tpu.pipeline_mode<synchronous>, transform_indices = @transform_3, window_bounds = array<i64: 32, 32>}, {pipeline_mode = #tpu.pipeline_mode<synchronous>, transform_indices = @transform_4, window_bounds = array<i64: 32, 1>}, {pipeline_mode = #tpu.pipeline_mode<synchronous>, transform_indices = @transform_5, window_bounds = array<i64: 1, 32>}, {pipeline_mode = #tpu.pipeline_mode<synchronous>, transform_indices = @transform_6, window_bounds = array<i64: 1, 1>}, {transform_indices = @transform_7, window_bounds = array<i64: 1, 128>}]} {
    %c0 = arith.constant 0 : index
    %c0_0 = arith.constant 0 : index
    %0 = vector.load %arg2[%c0, %c0_0] : memref<32x16xbf16, #tpu.memory_space<vmem>>, vector<32x16xbf16>
    %c0_1 = arith.constant 0 : index
    %c0_2 = arith.constant 0 : index
    %1 = vector.load %arg1[%c0_1, %c0_2] : memref<16x128xbf16, #tpu.memory_space<vmem>>, vector<16x128xbf16>
    %cst = arith.constant dense<0.000000e+00> : vector<32x128xf32>
    %2 = tpu.matmul %0, %1, %cst {dimension_numbers = #tpu.dot_dimension_numbers<[1], [0], [0], [1], [0, 0, 1, 1], [], []>} : vector<32x16xbf16>, vector<16x128xbf16>, vector<32x128xf32> -> vector<32x128xf32>
    %c0_3 = arith.constant 0 : index
    %c0_4 = arith.constant 0 : index
    %3 = vector.load %arg3[%c0_3, %c0_4] : memref<32x1xf32, #tpu.memory_space<vmem>>, vector<32x1xf32>
    %4 = vector.broadcast %3 : vector<32x1xf32> to vector<32x128xf32>
    %5 = arith.addf %2, %4 : vector<32x128xf32>
    %6 = math.tanh %5 : vector<32x128xf32>
    %c0_5 = arith.constant 0 : index
    %c0_6 = arith.constant 0 : index
    %7 = vector.load %arg4[%c0_5, %c0_6] : memref<32x32xbf16, #tpu.memory_space<vmem>>, vector<32x32xbf16>
    %8 = arith.truncf %6 : vector<32x128xf32> to vector<32x128xbf16>
    %cst_7 = arith.constant dense<0.000000e+00> : vector<32x128xf32>
    %9 = tpu.matmul %7, %8, %cst_7 {dimension_numbers = #tpu.dot_dimension_numbers<[1], [0], [0], [1], [0, 0, 1, 1], [], []>} : vector<32x32xbf16>, vector<32x128xbf16>, vector<32x128xf32> -> vector<32x128xf32>
    %c0_8 = arith.constant 0 : index
    %c0_9 = arith.constant 0 : index
    %10 = vector.load %arg5[%c0_8, %c0_9] : memref<32x1xf32, #tpu.memory_space<vmem>>, vector<32x1xf32>
    %11 = vector.broadcast %10 : vector<32x1xf32> to vector<32x128xf32>
    %12 = arith.addf %9, %11 : vector<32x128xf32>
    %13 = math.tanh %12 : vector<32x128xf32>
    %c0_10 = arith.constant 0 : index
    %c0_11 = arith.constant 0 : index
    %14 = vector.load %arg6[%c0_10, %c0_11] : memref<1x32xbf16, #tpu.memory_space<vmem>>, vector<1x32xbf16>
    %15 = arith.truncf %13 : vector<32x128xf32> to vector<32x128xbf16>
    %cst_12 = arith.constant dense<0.000000e+00> : vector<1x128xf32>
    %16 = tpu.matmul %14, %15, %cst_12 {dimension_numbers = #tpu.dot_dimension_numbers<[1], [0], [0], [1], [0, 0, 1, 1], [], []>} : vector<1x32xbf16>, vector<32x128xbf16>, vector<1x128xf32> -> vector<1x128xf32>
    %c0_13 = arith.constant 0 : index
    %c0_14 = arith.constant 0 : index
    %17 = vector.load %arg7[%c0_13, %c0_14] : memref<1x1xf32, #tpu.memory_space<vmem>>, vector<1x1xf32>
    %18 = vector.broadcast %17 : vector<1x1xf32> to vector<1x128xf32>
    %19 = arith.addf %16, %18 : vector<1x128xf32>
    %c0_15 = arith.constant 0 : index
    %c0_16 = arith.constant 0 : index
    %20 = vector.load %arg8[%c0_15, %c0_16] : memref<1x128xf32, #tpu.memory_space<vmem>>, vector<1x128xf32>
    tpu.vector_store %arg8[%c0_15, %c0_16], %19 {strides = array<i32>} : memref<1x128xf32, #tpu.memory_space<vmem>>, vector<1x128xf32>,
    return
  }
  func.func @transform_0(%arg0: i32) -> (i32, i32) {
    %c0_i32 = arith.constant 0 : i32
    %c0_i32_0 = arith.constant 0 : i32
    return %c0_i32, %arg0 : i32, i32
  }
  func.func @transform_1(%arg0: i32) -> (i32, i32) {
    %c0_i32 = arith.constant 0 : i32
    %c0_i32_0 = arith.constant 0 : i32
    %c0_i32_1 = arith.constant 0 : i32
    return %c0_i32, %c0_i32_0 : i32, i32
  }
  func.func @transform_2(%arg0: i32) -> (i32, i32) {
    %c0_i32 = arith.constant 0 : i32
    %c0_i32_0 = arith.constant 0 : i32
    %c0_i32_1 = arith.constant 0 : i32
    return %c0_i32, %c0_i32_0 : i32, i32
  }
  func.func @transform_3(%arg0: i32) -> (i32, i32) {
    %c0_i32 = arith.constant 0 : i32
    %c0_i32_0 = arith.constant 0 : i32
    %c0_i32_1 = arith.constant 0 : i32
    return %c0_i32, %c0_i32_0 : i32, i32
  }
  func.func @transform_4(%arg0: i32) -> (i32, i32) {
    %c0_i32 = arith.constant 0 : i32
    %c0_i32_0 = arith.constant 0 : i32
    %c0_i32_1 = arith.constant 0 : i32
    return %c0_i32, %c0_i32_0 : i32, i32
  }
  func.func @transform_5(%arg0: i32) -> (i32, i32) {
    %c0_i32 = arith.constant 0 : i32
    %c0_i32_0 = arith.constant 0 : i32
    %c0_i32_1 = arith.constant 0 : i32
    return %c0_i32, %c0_i32_0 : i32, i32
  }
  func.func @transform_6(%arg0: i32) -> (i32, i32) {
    %c0_i32 = arith.constant 0 : i32
    %c0_i32_0 = arith.constant 0 : i32
    %c0_i32_1 = arith.constant 0 : i32
    return %c0_i32, %c0_i32_0 : i32, i32
  }
  func.func @transform_7(%arg0: i32) -> (i32, i32) {
    %c0_i32 = arith.constant 0 : i32
    %c0_i32_0 = arith.constant 0 : i32
    return %c0_i32, %arg0 : i32, i32
  }
}

</mosaic_0001>

<llo_original>
// kernel: nonlinear_critic_forward.1
$region0: #{nonlinear_critic_forward.1}
  #allocation0 [shape = 'u32[]', space=smem, size = 0x4, offset = 0x4, fixed_abs, tag = 'smem constant byte address 0x4 - core index']
  #allocation1 [shape = 'u32[72,128]{1,0:T(1,128)}', space=vmem, size = 0x9000, scoped, tag = 'internal scratch']
  #allocation2 [shape = 'f32[1,1]{1,0:T(1,128)S(1)}', space=vmem, size = 0x200, scoped, tag = 'scoped memory for nonlinear_critic_forward.1']
  %s0 = inlined_call_operand.vmem [shape: bf16[16,128], index: 0, kind: input, shape index: {}]
  %s1 = inlined_call_operand.vmem [shape: bf16[32,16], index: 1, kind: input, shape index: {}]
  %s2 = inlined_call_operand.vmem [shape: f32[32,1], index: 2, kind: input, shape index: {}]
  %s3 = inlined_call_operand.vmem [shape: bf16[32,32], index: 3, kind: input, shape index: {}]
  %s4 = inlined_call_operand.vmem [shape: f32[32,1], index: 4, kind: input, shape index: {}]
  %s5 = inlined_call_operand.vmem [shape: bf16[1,32], index: 5, kind: input, shape index: {}]
  %s6 = inlined_call_operand.<no memory space> [shape: f32[1,1], index: 6, kind: input, shape index: {}]
  %s7 = inlined_call_operand.vmem [shape: f32[1,128], index: 7, kind: output, shape index: {}]
  %s8 = sld [smem:[#allocation0]]
  $region38: #{nonlinear_critic_forward.1} parent=0
    _
  %s10 = ssub.s32 1, %s8
  %s11 = scalar_select 0, %s10, %s8
  %v12 = vstv %s6
  %13 = vst [vmem:[#allocation2] sm:$0x1] %v12
  // Predicated region
  $region2: #{nonlinear_critic_forward.1} parent=0 // pred_check
    _
  $region3: #{nonlinear_critic_forward.1} parent=0 // pred_check_branch
    %15 = sbr.rel (0) target = $region5
  $region4: #{nonlinear_critic_forward.1} parent=0 // pred_region
    _
  $region5: #{nonlinear_critic_forward.1} parent=0 // pred_fallthru
    _
  // Predicated region
  $region6: #{nonlinear_critic_forward.1} parent=0 // pred_check
    _
  $region7: #{nonlinear_critic_forward.1} parent=0 // pred_check_branch
    %17 = sbr.rel (0) target = $region9
  $region8: #{nonlinear_critic_forward.1} parent=0 // pred_region
    _
  $region9: #{nonlinear_critic_forward.1} parent=0 // pred_fallthru
    _
  // Predicated region
  $region10: #{nonlinear_critic_forward.1} parent=0 // pred_check
    _
  $region11: #{nonlinear_critic_forward.1} parent=0 // pred_check_branch
    %19 = sbr.rel (0) target = $region13
  $region12: #{nonlinear_critic_forward.1} parent=0 // pred_region
    _
  $region13: #{nonlinear_critic_forward.1} parent=0 // pred_fallthru
    _
  // Predicated region
  $region14: #{nonlinear_critic_forward.1} parent=0 // pred_check
    _
  $region15: #{nonlinear_critic_forward.1} parent=0 // pred_check_branch
    %21 = sbr.rel (0) target = $region17
  $region16: #{nonlinear_critic_forward.1} parent=0 // pred_region
    _
  $region17: #{nonlinear_critic_forward.1} parent=0 // pred_fallthru
    _
  // Predicated region
  $region18: #{nonlinear_critic_forward.1} parent=0 // pred_check
    _
  $region19: #{nonlinear_critic_forward.1} parent=0 // pred_check_branch
    %23 = sbr.rel (0) target = $region21
  $region20: #{nonlinear_critic_forward.1} parent=0 // pred_region
    _
  $region21: #{nonlinear_critic_forward.1} parent=0 // pred_fallthru
    _
  // Predicated region
  $region22: #{nonlinear_critic_forward.1} parent=0 // pred_check
    _
  $region23: #{nonlinear_critic_forward.1} parent=0 // pred_check_branch
    %25 = sbr.rel (0) target = $region25
  $region24: #{nonlinear_critic_forward.1} parent=0 // pred_region
    _
  $region25: #{nonlinear_critic_forward.1} parent=0 // pred_fallthru
    _
  // Predicated region
  $region26: #{nonlinear_critic_forward.1} parent=0 // pred_check
    _
  $region27: #{nonlinear_critic_forward.1} parent=0 // pred_check_branch
    %27 = sbr.rel (0) target = $region29
  $region28: #{nonlinear_critic_forward.1} parent=0 // pred_region
    _
  $region29: #{nonlinear_critic_forward.1} parent=0 // pred_fallthru
    _
  %v29 = vld [vmem:[%s1] sm:$0xf]
  %v30 = vld [vmem:[%s1 + $0x4] sm:$0xf]
  %v31 = vld [vmem:[%s1 + $0x8] sm:$0xf]
  %v32 = vld [vmem:[%s1 + $0xc] sm:$0xf]
  %v33 = vld [vmem:[%s0] sm:$0xf]
  %v34 = vld [vmem:[%s0 + $0x4] sm:$0xf]
  %v35 = vld [vmem:[%s2] sm:$0xff]
  %v36 = vld [vmem:[%s2 + $0x8] sm:$0xff]
  %v37 = vld [vmem:[%s2 + $0x10] sm:$0xff]
  %v38 = vld [vmem:[%s2 + $0x18] sm:$0xff]
  %40 = vset.pattern.permute.xlu0 0
  %41 = vperm.xlu0 %40, %v35
  %v42 = vpop.permute.xlu0 %41
  %45 = vset.pattern.permute.xlu0 0
  %46 = vperm.xlu0 %45, %v36
  %v47 = vpop.permute.xlu0 %46
  %50 = vset.pattern.permute.xlu0 0
  %51 = vperm.xlu0 %50, %v37
  %v52 = vpop.permute.xlu0 %51
  %55 = vset.pattern.permute.xlu0 0
  %56 = vperm.xlu0 %55, %v38
  %v57 = vpop.permute.xlu0 %56
  %v63 = vunpack.c.l.b16 %v29
  %v64 = vunpack.c.l.b16 %v30
  %v65 = vunpack.c.l.b16 %v31
  %v66 = vunpack.c.l.b16 %v32
  %v67 = vpack.c.b16 %v64, %v63
  %v68 = vpack.c.b16 %v66, %v65
  %v71 = vunpack.c.l.b16 %v33
  %v72 = vunpack.c.l.b16 %v34
  %v73 = vpack.c.b16 %v72, %v71
  %vm75 = vcmask 130048
  %v77 = vsel %vm75, %v67, 0
  %v80 = vsel %vm75, %v68, 0
  %82 = vmatpush.bf16.msra.mxu0 0
  %83 = vmatpush.bf16.msra.mxu0 0
  %84 = vmatpush.bf16.msra.mxu0 0
  %85 = vmatpush.bf16.msra.mxu0 0
  %86 = vmatpush.bf16.msra.mxu0 0
  %87 = vmatpush.bf16.msra.mxu0 0
  %88 = vmatpush.bf16.msra.mxu0 0
  %89 = vmatpush.bf16.msra.mxu0 %v73
  %90 = vmatmul.bf16.gmra.mxu0 %v77
  %v91 = vpop.f32.mrf.mxu0
  %v92 = vadd.f32 %v42, %v91
  %v93 = vpop.f32.mrf.mxu0
  %v94 = vadd.f32 %v47, %v93
  %95 = vmatmul.bf16.gmra.mxu0 %v80
  %v96 = vpop.f32.mrf.mxu0
  %v97 = vadd.f32 %v52, %v96
  %v98 = vpop.f32.mrf.mxu0
  %v99 = vadd.f32 %v57, %v98
  %100 = vdwg.mxu0
  %v101 = vtanh.pop %v92
  %v102 = vtanh.pop %v94
  %v103 = vtanh.pop %v97
  %v104 = vtanh.pop %v99
  %v105 = vld [vmem:[%s3] sm:$0xf]
  %v106 = vld [vmem:[%s3 + $0x4] sm:$0xf]
  %v107 = vld [vmem:[%s3 + $0x8] sm:$0xf]
  %v108 = vld [vmem:[%s3 + $0xc] sm:$0xf]
  %v109 = vpack.c.bf16 %v102, %v101
  %v110 = vpack.c.bf16 %v104, %v103
  %v111 = vld [vmem:[%s4] sm:$0xff]
  %v112 = vld [vmem:[%s4 + $0x8] sm:$0xff]
  %v113 = vld [vmem:[%s4 + $0x10] sm:$0xff]
  %v114 = vld [vmem:[%s4 + $0x18] sm:$0xff]
  %116 = vset.pattern.permute.xlu0 0
  %117 = vperm.xlu0 %116, %v111
  %v118 = vpop.permute.xlu0 %117
  %121 = vset.pattern.permute.xlu0 0
  %122 = vperm.xlu0 %121, %v112
  %v123 = vpop.permute.xlu0 %122
  %126 = vset.pattern.permute.xlu0 0
  %127 = vperm.xlu0 %126, %v113
  %v128 = vpop.permute.xlu0 %127
  %131 = vset.pattern.permute.xlu0 0
  %132 = vperm.xlu0 %131, %v114
  %v133 = vpop.permute.xlu0 %132
  %v139 = vunpack.c.l.b16 %v105
  %v140 = vunpack.c.l.b16 %v106
  %v141 = vunpack.c.l.b16 %v107
  %v142 = vunpack.c.l.b16 %v108
  %v143 = vpack.c.b16 %v140, %v139
  %v144 = vpack.c.b16 %v142, %v141
  %vm145 = vcmask 261120
  %v147 = vsel %vm145, %v143, 0
  %v150 = vsel %vm145, %v144, 0
  %152 = vmatpush.bf16.msra.mxu0 0
  %153 = vmatpush.bf16.msra.mxu0 0
  %154 = vmatpush.bf16.msra.mxu0 0
  %155 = vmatpush.bf16.msra.mxu0 0
  %156 = vmatpush.bf16.msra.mxu0 0
  %157 = vmatpush.bf16.msra.mxu0 0
  %158 = vmatpush.bf16.msra.mxu0 %v110
  %159 = vmatpush.bf16.msra.mxu0 %v109
  %160 = vmatmul.bf16.gmra.mxu0 %v147
  %v161 = vpop.f32.mrf.mxu0
  %v162 = vadd.f32 %v118, %v161
  %v163 = vpop.f32.mrf.mxu0
  %v164 = vadd.f32 %v123, %v163
  %165 = vmatmul.bf16.gmra.mxu0 %v150
  %v166 = vpop.f32.mrf.mxu0
  %v167 = vadd.f32 %v128, %v166
  %v168 = vpop.f32.mrf.mxu0
  %v169 = vadd.f32 %v133, %v168
  %170 = vdwg.mxu0
  %v171 = vtanh.pop %v162
  %v172 = vtanh.pop %v164
  %v173 = vtanh.pop %v167
  %v174 = vtanh.pop %v169
  %v175 = vld [vmem:[%s5] sm:$0x1]
  %v176 = vpack.c.bf16 %v172, %v171
  %v177 = vpack.c.bf16 %v174, %v173
  %v178 = vld [vmem:[#allocation2] sm:$0x1]
  %180 = vset.pattern.permute.xlu0 0
  %181 = vperm.xlu0 %180, %v178
  %v182 = vpop.permute.xlu0 %181
  %v184 = vperm.slane %v182, 0
  %v186 = vsel %vm145, %v175, 0
  %188 = vmatpush.bf16.msra.mxu0 0
  %189 = vmatpush.bf16.msra.mxu0 0
  %190 = vmatpush.bf16.msra.mxu0 0
  %191 = vmatpush.bf16.msra.mxu0 0
  %192 = vmatpush.bf16.msra.mxu0 0
  %193 = vmatpush.bf16.msra.mxu0 0
  %194 = vmatpush.bf16.msra.mxu0 %v177
  %195 = vmatpush.bf16.msra.mxu0 %v176
  %196 = vmatmul.bf16.gmra.mxu0 %v186
  %v197 = vpop.f32.mrf.mxu0
  %v198 = vadd.f32 %v184, %v197
  %v199 = vpop.f32.mrf.mxu0
  %200 = vdwg.mxu0
  %201 = vst [vmem:[%s7] sm:$0x1] %v198
  // Predicated region
  $region30: #{nonlinear_critic_forward.1} parent=0 // pred_check
    _
  $region31: #{nonlinear_critic_forward.1} parent=0 // pred_check_branch
    %203 = sbr.rel (0) target = $region33
  $region32: #{nonlinear_critic_forward.1} parent=0 // pred_region
    _
  $region33: #{nonlinear_critic_forward.1} parent=0 // pred_fallthru
    _
  // Predicated region
  $region34: #{nonlinear_critic_forward.1} parent=0 // pred_check
    _
  $region35: #{nonlinear_critic_forward.1} parent=0 // pred_check_branch
    %205 = sbr.rel (0) target = $region37
  $region36: #{nonlinear_critic_forward.1} parent=0 // pred_region
    _
  $region37: #{nonlinear_critic_forward.1} parent=0 // pred_fallthru
    _

</llo_original>
